<compile_context>
chip_gen: v6e
topology: v6e:2x2x1
jax: 0.10.0
libtpu: 0.0.40
codegen_flags: <defaults>
</compile_context>

<pallas_src>
import jax
import jax.numpy as jnp
from jax.experimental import pallas as pl
from jax.experimental.pallas import tpu as pltpu


def _lstm_classifier_kernel(x_ref, wih_ref, whh_ref, b_ref,
                            w1_ref, b1_ref, w2_ref, b2_ref, out_ref):
    Bp = out_ref.shape[0]          # padded batch (sublane multiple of 8)
    H = whh_ref.shape[0]
    T = x_ref.shape[0] // Bp       # x rows are time-major: row = t*Bp + b

    # Hoisted input projection for ALL timesteps: single MXU matmul, bias folded
    # in once so the broadcast+add never sits on the serial recurrence path.
    xw = (jnp.dot(x_ref[...], wih_ref[...], preferred_element_type=jnp.float32)
          + b_ref[...])                                   # (T*Bp, 4H)

    whh = whh_ref[...]                                    # (H, 4H), gates (i,f,o,g)
    h = jnp.zeros((Bp, H), jnp.float32)
    c = jnp.zeros((Bp, H), jnp.float32)

    # Static unroll over the short, compile-time-known sequence length.
    for t in range(T):
        gates = xw[t * Bp:(t + 1) * Bp, :] + jnp.dot(
            h, whh, preferred_element_type=jnp.float32)   # (Bp, 4H)
        # Gate order (i, f, o, g): one contiguous sigmoid over 3H, one tanh over H.
        sig = jax.nn.sigmoid(gates[:, :3 * H])
        g_g = jnp.tanh(gates[:, 3 * H:])
        i_g = sig[:, 0 * H:1 * H]
        f_g = sig[:, 1 * H:2 * H]
        o_g = sig[:, 2 * H:3 * H]
        c = f_g * c + i_g * g_g
        h = o_g * jnp.tanh(c)

    # Classifier head: Linear(H,128) -> ReLU -> Dropout(eval: identity) -> Linear(128,C)
    z = jnp.dot(h, w1_ref[...], preferred_element_type=jnp.float32) + b1_ref[...]
    z = jnp.maximum(z, 0.0)
    out_ref[...] = (jnp.dot(z, w2_ref[...], preferred_element_type=jnp.float32)
                    + b2_ref[...]).astype(out_ref.dtype)


def _permute_gate_cols(w, H):
    """Reorder last-axis gate blocks from PyTorch (i,f,g,o) to kernel (i,f,o,g)."""
    return jnp.concatenate(
        [w[..., 0:2 * H], w[..., 3 * H:4 * H], w[..., 2 * H:3 * H]], axis=-1)


def lstm_classifier_forward(x_btd, params):
    """x_btd: (B, T, D) float32, batch-first like PyTorch. Returns (B, num_classes)."""
    B, T, D = x_btd.shape
    H = params["whh"].shape[0]
    C = params["w2"].shape[1]
    Bp = ((B + 7) // 8) * 8        # pad batch to the f32 sublane multiple

    # Time-major + zero-padded batch, collapsed to (T*Bp, D): each timestep is a
    # contiguous full-sublane block of rows inside the kernel.  Padded batch rows
    # evolve independently (garbage-but-harmless h/c) and are sliced off below.
    x_tbd = jnp.transpose(x_btd, (1, 0, 2))
    x_pad = jnp.zeros((T, Bp, D), x_btd.dtype).at[:, :B, :].set(x_tbd)
    x2d = x_pad.reshape(T * Bp, D)

    # One-time gate-column permutation (applied consistently to W_ih, W_hh, b).
    wih = _permute_gate_cols(params["wih"], H)
    whh = _permute_gate_cols(params["whh"], H)
    b = _permute_gate_cols(params["b"], H)

    vmem = pl.BlockSpec(memory_space=pltpu.MemorySpace.VMEM)
    out = pl.pallas_call(
        _lstm_classifier_kernel,
        out_shape=jax.ShapeDtypeStruct((Bp, C), jnp.float32),
        in_specs=[vmem] * 8,
        out_specs=vmem,
    )(x2d, wih, whh, b, params["w1"], params["b1"], params["w2"], params["b2"])
    return out[:B]


def init_params(key, input_dim=3, hidden_dim=64, num_classes=5):
    """Deterministic synthetic parameters, PyTorch gate order (i,f,g,o)."""
    ks = jax.random.split(key, 8)
    s_lstm = 1.0 / jnp.sqrt(hidden_dim)
    s_fc1 = 1.0 / jnp.sqrt(hidden_dim)
    s_fc2 = 1.0 / jnp.sqrt(128.0)
    u = lambda k, shape, s: jax.random.uniform(k, shape, jnp.float32, -s, s)
    wih = u(ks[0], (input_dim, 4 * hidden_dim), s_lstm)      # already transposed
    whh = u(ks[1], (hidden_dim, 4 * hidden_dim), s_lstm)
    b_ih = u(ks[2], (1, 4 * hidden_dim), s_lstm)
    b_hh = u(ks[3], (1, 4 * hidden_dim), s_lstm)
    w1 = u(ks[4], (hidden_dim, 128), s_fc1)
    b1 = u(ks[5], (1, 128), s_fc1)
    w2 = u(ks[6], (128, num_classes), s_fc2)
    b2 = u(ks[7], (1, num_classes), s_fc2)
    return {"wih": wih, "whh": whh, "b": b_ih + b_hh,
            "w1": w1, "b1": b1, "w2": w2, "b2": b2}


def reference_forward(x_btd, params):
    """Pure-JAX reference (mirrors PyTorch LSTM + classifier, eval mode, i,f,g,o)."""
    B, T, _ = x_btd.shape
    H = params["whh"].shape[0]
    h = jnp.zeros((B, H), jnp.float32)
    c = jnp.zeros((B, H), jnp.float32)
    for t in range(T):
        gates = x_btd[:, t, :] @ params["wih"] + h @ params["whh"] + params["b"]
        i_g = jax.nn.sigmoid(gates[:, 0 * H:1 * H])
        f_g = jax.nn.sigmoid(gates[:, 1 * H:2 * H])
        g_g = jnp.tanh(gates[:, 2 * H:3 * H])
        o_g = jax.nn.sigmoid(gates[:, 3 * H:4 * H])
        c = f_g * c + i_g * g_g
        h = o_g * jnp.tanh(c)
    z = jnp.maximum(h @ params["w1"] + params["b1"], 0.0)
    return z @ params["w2"] + params["b2"]


if __name__ == "__main__":
    key = jax.random.PRNGKey(0)
    k_x, k_p = jax.random.split(key)

    batch, seq_len, input_dim, hidden_dim, num_classes = 2, 8, 3, 64, 5
    x = jax.random.normal(k_x, (batch, seq_len, input_dim), jnp.float32)
    params = init_params(k_p, input_dim, hidden_dim, num_classes)

    fwd = jax.jit(lstm_classifier_forward)
    out = jax.block_until_ready(fwd(x, params))

    ref = reference_forward(x, params)
    assert out.shape == (batch, num_classes)
    assert jnp.allclose(out, ref, atol=1e-4, rtol=1e-4), "mismatch vs JAX reference"

    print("KERNEL_OK")
</pallas_src>

<mosaic_0001>
module attributes {stable_mosaic.version = 11 : i64} {
  func.func @_lstm_classifier_kernel(%arg0: memref<64x3xf32, #tpu.memory_space<vmem>>, %arg1: memref<3x256xf32, #tpu.memory_space<vmem>>, %arg2: memref<64x256xf32, #tpu.memory_space<vmem>>, %arg3: memref<1x256xf32, #tpu.memory_space<vmem>>, %arg4: memref<64x128xf32, #tpu.memory_space<vmem>>, %arg5: memref<1x128xf32, #tpu.memory_space<vmem>>, %arg6: memref<128x5xf32, #tpu.memory_space<vmem>>, %arg7: memref<1x5xf32, #tpu.memory_space<vmem>>, %arg8: memref<8x5xf32, #tpu.memory_space<vmem>>) attributes {dimension_semantics = [], scalar_prefetch = 0 : i64, scratch_operands = 0 : i64, tpu.core_type = #tpu.core_type<tc>} {
    %c0 = arith.constant 0 : index
    %c0_0 = arith.constant 0 : index
    %0 = vector.load %arg0[%c0, %c0_0] : memref<64x3xf32, #tpu.memory_space<vmem>>, vector<64x3xf32>
    %c0_1 = arith.constant 0 : index
    %c0_2 = arith.constant 0 : index
    %1 = vector.load %arg1[%c0_1, %c0_2] : memref<3x256xf32, #tpu.memory_space<vmem>>, vector<3x256xf32>
    %cst = arith.constant dense<0.000000e+00> : vector<64x256xf32>
    %2 = tpu.matmul %0, %1, %cst {dimension_numbers = #tpu.dot_dimension_numbers<[1], [0], [0], [1], [0, 0, 1, 1], [], []>} : vector<64x3xf32>, vector<3x256xf32>, vector<64x256xf32> -> vector<64x256xf32>
    %c0_3 = arith.constant 0 : index
    %c0_4 = arith.constant 0 : index
    %3 = vector.load %arg3[%c0_3, %c0_4] : memref<1x256xf32, #tpu.memory_space<vmem>>, vector<1x256xf32>
    %4 = vector.broadcast %3 : vector<1x256xf32> to vector<64x256xf32>
    %5 = arith.addf %2, %4 : vector<64x256xf32>
    %c0_5 = arith.constant 0 : index
    %c0_6 = arith.constant 0 : index
    %6 = vector.load %arg2[%c0_5, %c0_6] : memref<64x256xf32, #tpu.memory_space<vmem>>, vector<64x256xf32>
    %cst_7 = arith.constant 0.000000e+00 : f32
    %7 = vector.broadcast %cst_7 : f32 to vector<8x64xf32>
    %cst_8 = arith.constant 0.000000e+00 : f32
    %8 = vector.broadcast %cst_8 : f32 to vector<8x64xf32>
    %9 = vector.extract_strided_slice %5 {offsets = [0, 0], sizes = [8, 256], strides = [1, 1]} : vector<64x256xf32> to vector<8x256xf32>
    %cst_9 = arith.constant dense<0.000000e+00> : vector<8x256xf32>
    %10 = tpu.matmul %7, %6, %cst_9 {dimension_numbers = #tpu.dot_dimension_numbers<[1], [0], [0], [1], [0, 0, 1, 1], [], []>} : vector<8x64xf32>, vector<64x256xf32>, vector<8x256xf32> -> vector<8x256xf32>
    %11 = arith.addf %9, %10 : vector<8x256xf32>
    %12 = vector.extract_strided_slice %11 {offsets = [0, 0], sizes = [8, 192], strides = [1, 1]} : vector<8x256xf32> to vector<8x192xf32>
    %13 = arith.negf %12 : vector<8x192xf32>
    %14 = math.exp %13 : vector<8x192xf32>
    %cst_10 = arith.constant 1.000000e+00 : f32
    %15 = vector.broadcast %cst_10 : f32 to vector<8x192xf32>
    %16 = arith.addf %15, %14 : vector<8x192xf32>
    %17 = arith.divf %15, %16 : vector<8x192xf32>
    %18 = vector.extract_strided_slice %11 {offsets = [0, 192], sizes = [8, 64], strides = [1, 1]} : vector<8x256xf32> to vector<8x64xf32>
    %19 = math.tanh %18 : vector<8x64xf32>
    %20 = vector.extract_strided_slice %17 {offsets = [0, 0], sizes = [8, 64], strides = [1, 1]} : vector<8x192xf32> to vector<8x64xf32>
    %21 = vector.extract_strided_slice %17 {offsets = [0, 64], sizes = [8, 64], strides = [1, 1]} : vector<8x192xf32> to vector<8x64xf32>
    %22 = vector.extract_strided_slice %17 {offsets = [0, 128], sizes = [8, 64], strides = [1, 1]} : vector<8x192xf32> to vector<8x64xf32>
    %23 = arith.mulf %21, %8 : vector<8x64xf32>
    %24 = arith.mulf %20, %19 : vector<8x64xf32>
    %25 = arith.addf %23, %24 : vector<8x64xf32>
    %26 = math.tanh %25 : vector<8x64xf32>
    %27 = arith.mulf %22, %26 : vector<8x64xf32>
    %28 = vector.extract_strided_slice %5 {offsets = [8, 0], sizes = [8, 256], strides = [1, 1]} : vector<64x256xf32> to vector<8x256xf32>
    %cst_11 = arith.constant dense<0.000000e+00> : vector<8x256xf32>
    %29 = tpu.matmul %27, %6, %cst_11 {dimension_numbers = #tpu.dot_dimension_numbers<[1], [0], [0], [1], [0, 0, 1, 1], [], []>} : vector<8x64xf32>, vector<64x256xf32>, vector<8x256xf32> -> vector<8x256xf32>
    %30 = arith.addf %28, %29 : vector<8x256xf32>
    %31 = vector.extract_strided_slice %30 {offsets = [0, 0], sizes = [8, 192], strides = [1, 1]} : vector<8x256xf32> to vector<8x192xf32>
    %32 = arith.negf %31 : vector<8x192xf32>
    %33 = math.exp %32 : vector<8x192xf32>
    %cst_12 = arith.constant 1.000000e+00 : f32
    %34 = vector.broadcast %cst_12 : f32 to vector<8x192xf32>
    %35 = arith.addf %34, %33 : vector<8x192xf32>
    %36 = arith.divf %34, %35 : vector<8x192xf32>
    %37 = vector.extract_strided_slice %30 {offsets = [0, 192], sizes = [8, 64], strides = [1, 1]} : vector<8x256xf32> to vector<8x64xf32>
    %38 = math.tanh %37 : vector<8x64xf32>
    %39 = vector.extract_strided_slice %36 {offsets = [0, 0], sizes = [8, 64], strides = [1, 1]} : vector<8x192xf32> to vector<8x64xf32>
    %40 = vector.extract_strided_slice %36 {offsets = [0, 64], sizes = [8, 64], strides = [1, 1]} : vector<8x192xf32> to vector<8x64xf32>
    %41 = vector.extract_strided_slice %36 {offsets = [0, 128], sizes = [8, 64], strides = [1, 1]} : vector<8x192xf32> to vector<8x64xf32>
    %42 = arith.mulf %40, %25 : vector<8x64xf32>
    %43 = arith.mulf %39, %38 : vector<8x64xf32>
    %44 = arith.addf %42, %43 : vector<8x64xf32>
    %45 = math.tanh %44 : vector<8x64xf32>
    %46 = arith.mulf %41, %45 : vector<8x64xf32>
    %47 = vector.extract_strided_slice %5 {offsets = [16, 0], sizes = [8, 256], strides = [1, 1]} : vector<64x256xf32> to vector<8x256xf32>
    %cst_13 = arith.constant dense<0.000000e+00> : vector<8x256xf32>
    %48 = tpu.matmul %46, %6, %cst_13 {dimension_numbers = #tpu.dot_dimension_numbers<[1], [0], [0], [1], [0, 0, 1, 1], [], []>} : vector<8x64xf32>, vector<64x256xf32>, vector<8x256xf32> -> vector<8x256xf32>
    %49 = arith.addf %47, %48 : vector<8x256xf32>
    %50 = vector.extract_strided_slice %49 {offsets = [0, 0], sizes = [8, 192], strides = [1, 1]} : vector<8x256xf32> to vector<8x192xf32>
    %51 = arith.negf %50 : vector<8x192xf32>
    %52 = math.exp %51 : vector<8x192xf32>
    %cst_14 = arith.constant 1.000000e+00 : f32
    %53 = vector.broadcast %cst_14 : f32 to vector<8x192xf32>
    %54 = arith.addf %53, %52 : vector<8x192xf32>
    %55 = arith.divf %53, %54 : vector<8x192xf32>
    %56 = vector.extract_strided_slice %49 {offsets = [0, 192], sizes = [8, 64], strides = [1, 1]} : vector<8x256xf32> to vector<8x64xf32>
    %57 = math.tanh %56 : vector<8x64xf32>
    %58 = vector.extract_strided_slice %55 {offsets = [0, 0], sizes = [8, 64], strides = [1, 1]} : vector<8x192xf32> to vector<8x64xf32>
    %59 = vector.extract_strided_slice %55 {offsets = [0, 64], sizes = [8, 64], strides = [1, 1]} : vector<8x192xf32> to vector<8x64xf32>
    %60 = vector.extract_strided_slice %55 {offsets = [0, 128], sizes = [8, 64], strides = [1, 1]} : vector<8x192xf32> to vector<8x64xf32>
    %61 = arith.mulf %59, %44 : vector<8x64xf32>
    %62 = arith.mulf %58, %57 : vector<8x64xf32>
    %63 = arith.addf %61, %62 : vector<8x64xf32>
    %64 = math.tanh %63 : vector<8x64xf32>
    %65 = arith.mulf %60, %64 : vector<8x64xf32>
    %66 = vector.extract_strided_slice %5 {offsets = [24, 0], sizes = [8, 256], strides = [1, 1]} : vector<64x256xf32> to vector<8x256xf32>
    %cst_15 = arith.constant dense<0.000000e+00> : vector<8x256xf32>
    %67 = tpu.matmul %65, %6, %cst_15 {dimension_numbers = #tpu.dot_dimension_numbers<[1], [0], [0], [1], [0, 0, 1, 1], [], []>} : vector<8x64xf32>, vector<64x256xf32>, vector<8x256xf32> -> vector<8x256xf32>
    %68 = arith.addf %66, %67 : vector<8x256xf32>
    %69 = vector.extract_strided_slice %68 {offsets = [0, 0], sizes = [8, 192], strides = [1, 1]} : vector<8x256xf32> to vector<8x192xf32>
    %70 = arith.negf %69 : vector<8x192xf32>
    %71 = math.exp %70 : vector<8x192xf32>
    %cst_16 = arith.constant 1.000000e+00 : f32
    %72 = vector.broadcast %cst_16 : f32 to vector<8x192xf32>
    %73 = arith.addf %72, %71 : vector<8x192xf32>
    %74 = arith.divf %72, %73 : vector<8x192xf32>
    %75 = vector.extract_strided_slice %68 {offsets = [0, 192], sizes = [8, 64], strides = [1, 1]} : vector<8x256xf32> to vector<8x64xf32>
    %76 = math.tanh %75 : vector<8x64xf32>
    %77 = vector.extract_strided_slice %74 {offsets = [0, 0], sizes = [8, 64], strides = [1, 1]} : vector<8x192xf32> to vector<8x64xf32>
    %78 = vector.extract_strided_slice %74 {offsets = [0, 64], sizes = [8, 64], strides = [1, 1]} : vector<8x192xf32> to vector<8x64xf32>
    %79 = vector.extract_strided_slice %74 {offsets = [0, 128], sizes = [8, 64], strides = [1, 1]} : vector<8x192xf32> to vector<8x64xf32>
    %80 = arith.mulf %78, %63 : vector<8x64xf32>
    %81 = arith.mulf %77, %76 : vector<8x64xf32>
    %82 = arith.addf %80, %81 : vector<8x64xf32>
    %83 = math.tanh %82 : vector<8x64xf32>
    %84 = arith.mulf %79, %83 : vector<8x64xf32>
    %85 = vector.extract_strided_slice %5 {offsets = [32, 0], sizes = [8, 256], strides = [1, 1]} : vector<64x256xf32> to vector<8x256xf32>
    %cst_17 = arith.constant dense<0.000000e+00> : vector<8x256xf32>
    %86 = tpu.matmul %84, %6, %cst_17 {dimension_numbers = #tpu.dot_dimension_numbers<[1], [0], [0], [1], [0, 0, 1, 1], [], []>} : vector<8x64xf32>, vector<64x256xf32>, vector<8x256xf32> -> vector<8x256xf32>
    %87 = arith.addf %85, %86 : vector<8x256xf32>
    %88 = vector.extract_strided_slice %87 {offsets = [0, 0], sizes = [8, 192], strides = [1, 1]} : vector<8x256xf32> to vector<8x192xf32>
    %89 = arith.negf %88 : vector<8x192xf32>
    %90 = math.exp %89 : vector<8x192xf32>
    %cst_18 = arith.constant 1.000000e+00 : f32
    %91 = vector.broadcast %cst_18 : f32 to vector<8x192xf32>
    %92 = arith.addf %91, %90 : vector<8x192xf32>
    %93 = arith.divf %91, %92 : vector<8x192xf32>
    %94 = vector.extract_strided_slice %87 {offsets = [0, 192], sizes = [8, 64], strides = [1, 1]} : vector<8x256xf32> to vector<8x64xf32>
    %95 = math.tanh %94 : vector<8x64xf32>
    %96 = vector.extract_strided_slice %93 {offsets = [0, 0], sizes = [8, 64], strides = [1, 1]} : vector<8x192xf32> to vector<8x64xf32>
    %97 = vector.extract_strided_slice %93 {offsets = [0, 64], sizes = [8, 64], strides = [1, 1]} : vector<8x192xf32> to vector<8x64xf32>
    %98 = vector.extract_strided_slice %93 {offsets = [0, 128], sizes = [8, 64], strides = [1, 1]} : vector<8x192xf32> to vector<8x64xf32>
    %99 = arith.mulf %97, %82 : vector<8x64xf32>
    %100 = arith.mulf %96, %95 : vector<8x64xf32>
    %101 = arith.addf %99, %100 : vector<8x64xf32>
    %102 = math.tanh %101 : vector<8x64xf32>
    %103 = arith.mulf %98, %102 : vector<8x64xf32>
    %104 = vector.extract_strided_slice %5 {offsets = [40, 0], sizes = [8, 256], strides = [1, 1]} : vector<64x256xf32> to vector<8x256xf32>
    %cst_19 = arith.constant dense<0.000000e+00> : vector<8x256xf32>
    %105 = tpu.matmul %103, %6, %cst_19 {dimension_numbers = #tpu.dot_dimension_numbers<[1], [0], [0], [1], [0, 0, 1, 1], [], []>} : vector<8x64xf32>, vector<64x256xf32>, vector<8x256xf32> -> vector<8x256xf32>
    %106 = arith.addf %104, %105 : vector<8x256xf32>
    %107 = vector.extract_strided_slice %106 {offsets = [0, 0], sizes = [8, 192], strides = [1, 1]} : vector<8x256xf32> to vector<8x192xf32>
    %108 = arith.negf %107 : vector<8x192xf32>
    %109 = math.exp %108 : vector<8x192xf32>
    %cst_20 = arith.constant 1.000000e+00 : f32
    %110 = vector.broadcast %cst_20 : f32 to vector<8x192xf32>
    %111 = arith.addf %110, %109 : vector<8x192xf32>
    %112 = arith.divf %110, %111 : vector<8x192xf32>
    %113 = vector.extract_strided_slice %106 {offsets = [0, 192], sizes = [8, 64], strides = [1, 1]} : vector<8x256xf32> to vector<8x64xf32>
    %114 = math.tanh %113 : vector<8x64xf32>
    %115 = vector.extract_strided_slice %112 {offsets = [0, 0], sizes = [8, 64], strides = [1, 1]} : vector<8x192xf32> to vector<8x64xf32>
    %116 = vector.extract_strided_slice %112 {offsets = [0, 64], sizes = [8, 64], strides = [1, 1]} : vector<8x192xf32> to vector<8x64xf32>
    %117 = vector.extract_strided_slice %112 {offsets = [0, 128], sizes = [8, 64], strides = [1, 1]} : vector<8x192xf32> to vector<8x64xf32>
    %118 = arith.mulf %116, %101 : vector<8x64xf32>
    %119 = arith.mulf %115, %114 : vector<8x64xf32>
    %120 = arith.addf %118, %119 : vector<8x64xf32>
    %121 = math.tanh %120 : vector<8x64xf32>
    %122 = arith.mulf %117, %121 : vector<8x64xf32>
    %123 = vector.extract_strided_slice %5 {offsets = [48, 0], sizes = [8, 256], strides = [1, 1]} : vector<64x256xf32> to vector<8x256xf32>
    %cst_21 = arith.constant dense<0.000000e+00> : vector<8x256xf32>
    %124 = tpu.matmul %122, %6, %cst_21 {dimension_numbers = #tpu.dot_dimension_numbers<[1], [0], [0], [1], [0, 0, 1, 1], [], []>} : vector<8x64xf32>, vector<64x256xf32>, vector<8x256xf32> -> vector<8x256xf32>
    %125 = arith.addf %123, %124 : vector<8x256xf32>
    %126 = vector.extract_strided_slice %125 {offsets = [0, 0], sizes = [8, 192], strides = [1, 1]} : vector<8x256xf32> to vector<8x192xf32>
    %127 = arith.negf %126 : vector<8x192xf32>
    %128 = math.exp %127 : vector<8x192xf32>
    %cst_22 = arith.constant 1.000000e+00 : f32
    %129 = vector.broadcast %cst_22 : f32 to vector<8x192xf32>
    %130 = arith.addf %129, %128 : vector<8x192xf32>
    %131 = arith.divf %129, %130 : vector<8x192xf32>
    %132 = vector.extract_strided_slice %125 {offsets = [0, 192], sizes = [8, 64], strides = [1, 1]} : vector<8x256xf32> to vector<8x64xf32>
    %133 = math.tanh %132 : vector<8x64xf32>
    %134 = vector.extract_strided_slice %131 {offsets = [0, 0], sizes = [8, 64], strides = [1, 1]} : vector<8x192xf32> to vector<8x64xf32>
    %135 = vector.extract_strided_slice %131 {offsets = [0, 64], sizes = [8, 64], strides = [1, 1]} : vector<8x192xf32> to vector<8x64xf32>
    %136 = vector.extract_strided_slice %131 {offsets = [0, 128], sizes = [8, 64], strides = [1, 1]} : vector<8x192xf32> to vector<8x64xf32>
    %137 = arith.mulf %135, %120 : vector<8x64xf32>
    %138 = arith.mulf %134, %133 : vector<8x64xf32>
    %139 = arith.addf %137, %138 : vector<8x64xf32>
    %140 = math.tanh %139 : vector<8x64xf32>
    %141 = arith.mulf %136, %140 : vector<8x64xf32>
    %142 = vector.extract_strided_slice %5 {offsets = [56, 0], sizes = [8, 256], strides = [1, 1]} : vector<64x256xf32> to vector<8x256xf32>
    %cst_23 = arith.constant dense<0.000000e+00> : vector<8x256xf32>
    %143 = tpu.matmul %141, %6, %cst_23 {dimension_numbers = #tpu.dot_dimension_numbers<[1], [0], [0], [1], [0, 0, 1, 1], [], []>} : vector<8x64xf32>, vector<64x256xf32>, vector<8x256xf32> -> vector<8x256xf32>
    %144 = arith.addf %142, %143 : vector<8x256xf32>
    %145 = vector.extract_strided_slice %144 {offsets = [0, 0], sizes = [8, 192], strides = [1, 1]} : vector<8x256xf32> to vector<8x192xf32>
    %146 = arith.negf %145 : vector<8x192xf32>
    %147 = math.exp %146 : vector<8x192xf32>
    %cst_24 = arith.constant 1.000000e+00 : f32
    %148 = vector.broadcast %cst_24 : f32 to vector<8x192xf32>
    %149 = arith.addf %148, %147 : vector<8x192xf32>
    %150 = arith.divf %148, %149 : vector<8x192xf32>
    %151 = vector.extract_strided_slice %144 {offsets = [0, 192], sizes = [8, 64], strides = [1, 1]} : vector<8x256xf32> to vector<8x64xf32>
    %152 = math.tanh %151 : vector<8x64xf32>
    %153 = vector.extract_strided_slice %150 {offsets = [0, 0], sizes = [8, 64], strides = [1, 1]} : vector<8x192xf32> to vector<8x64xf32>
    %154 = vector.extract_strided_slice %150 {offsets = [0, 64], sizes = [8, 64], strides = [1, 1]} : vector<8x192xf32> to vector<8x64xf32>
    %155 = vector.extract_strided_slice %150 {offsets = [0, 128], sizes = [8, 64], strides = [1, 1]} : vector<8x192xf32> to vector<8x64xf32>
    %156 = arith.mulf %154, %139 : vector<8x64xf32>
    %157 = arith.mulf %153, %152 : vector<8x64xf32>
    %158 = arith.addf %156, %157 : vector<8x64xf32>
    %159 = math.tanh %158 : vector<8x64xf32>
    %160 = arith.mulf %155, %159 : vector<8x64xf32>
    %c0_25 = arith.constant 0 : index
    %c0_26 = arith.constant 0 : index
    %161 = vector.load %arg4[%c0_25, %c0_26] : memref<64x128xf32, #tpu.memory_space<vmem>>, vector<64x128xf32>
    %cst_27 = arith.constant dense<0.000000e+00> : vector<8x128xf32>
    %162 = tpu.matmul %160, %161, %cst_27 {dimension_numbers = #tpu.dot_dimension_numbers<[1], [0], [0], [1], [0, 0, 1, 1], [], []>} : vector<8x64xf32>, vector<64x128xf32>, vector<8x128xf32> -> vector<8x128xf32>
    %c0_28 = arith.constant 0 : index
    %c0_29 = arith.constant 0 : index
    %163 = vector.load %arg5[%c0_28, %c0_29] : memref<1x128xf32, #tpu.memory_space<vmem>>, vector<1x128xf32>
    %164 = vector.broadcast %163 : vector<1x128xf32> to vector<8x128xf32>
    %165 = arith.addf %162, %164 : vector<8x128xf32>
    %cst_30 = arith.constant 0.000000e+00 : f32
    %166 = vector.broadcast %cst_30 : f32 to vector<8x128xf32>
    %167 = arith.maximumf %165, %166 : vector<8x128xf32>
    %c0_31 = arith.constant 0 : index
    %c0_32 = arith.constant 0 : index
    %168 = vector.load %arg6[%c0_31, %c0_32] : memref<128x5xf32, #tpu.memory_space<vmem>>, vector<128x5xf32>
    %cst_33 = arith.constant dense<0.000000e+00> : vector<8x5xf32>
    %169 = tpu.matmul %167, %168, %cst_33 {dimension_numbers = #tpu.dot_dimension_numbers<[1], [0], [0], [1], [0, 0, 1, 1], [], []>} : vector<8x128xf32>, vector<128x5xf32>, vector<8x5xf32> -> vector<8x5xf32>
    %c0_34 = arith.constant 0 : index
    %c0_35 = arith.constant 0 : index
    %170 = vector.load %arg7[%c0_34, %c0_35] : memref<1x5xf32, #tpu.memory_space<vmem>>, vector<1x5xf32>
    %171 = vector.broadcast %170 : vector<1x5xf32> to vector<8x5xf32>
    %172 = arith.addf %169, %171 : vector<8x5xf32>
    %c0_36 = arith.constant 0 : index
    %c0_37 = arith.constant 0 : index
    %173 = vector.load %arg8[%c0_36, %c0_37] : memref<8x5xf32, #tpu.memory_space<vmem>>, vector<8x5xf32>
    tpu.vector_store %arg8[%c0_36, %c0_37], %172 {strides = array<i32>} : memref<8x5xf32, #tpu.memory_space<vmem>>, vector<8x5xf32>,
    return
  }
}

</mosaic_0001>

<llo_original>
// kernel: lstm_classifier_forward.1
$region0: #{lstm_classifier_forward.1}
  #allocation0 [shape = 'u32[]', space=smem, size = 0x4, offset = 0x4, fixed_abs, tag = 'smem constant byte address 0x4 - core index']
  #allocation1 [shape = 'u32[144,128]{1,0:T(1,128)}', space=vmem, size = 0x12000, scoped, tag = 'internal scratch']
  %s0 = inlined_call_operand.vmem [shape: f32[64,3], index: 0, kind: input, shape index: {}]
  %s1 = inlined_call_operand.vmem [shape: f32[3,256], index: 1, kind: input, shape index: {}]
  %s2 = inlined_call_operand.vmem [shape: f32[64,256], index: 2, kind: input, shape index: {}]
  %s3 = inlined_call_operand.vmem [shape: f32[1,256], index: 3, kind: input, shape index: {}]
  %s4 = inlined_call_operand.vmem [shape: f32[64,128], index: 4, kind: input, shape index: {}]
  %s5 = inlined_call_operand.vmem [shape: f32[1,128], index: 5, kind: input, shape index: {}]
  %s6 = inlined_call_operand.vmem [shape: f32[128,5], index: 6, kind: input, shape index: {}]
  %s7 = inlined_call_operand.vmem [shape: f32[1,5], index: 7, kind: input, shape index: {}]
  %s8 = inlined_call_operand.vmem [shape: f32[8,5], index: 8, kind: output, shape index: {}]
  %s9 = sld [smem:[#allocation0]]
  $region42: #{lstm_classifier_forward.1} parent=0
    _
  %s11 = ssub.s32 1, %s9
  %s12 = scalar_select 0, %s11, %s9
  // Predicated region
  $region2: #{lstm_classifier_forward.1} parent=0 // pred_check
    _
  $region3: #{lstm_classifier_forward.1} parent=0 // pred_check_branch
    %14 = sbr.rel (0) target = $region5
  $region4: #{lstm_classifier_forward.1} parent=0 // pred_region
    _
  $region5: #{lstm_classifier_forward.1} parent=0 // pred_fallthru
    _
  // Predicated region
  $region6: #{lstm_classifier_forward.1} parent=0 // pred_check
    _
  $region7: #{lstm_classifier_forward.1} parent=0 // pred_check_branch
    %16 = sbr.rel (0) target = $region9
  $region8: #{lstm_classifier_forward.1} parent=0 // pred_region
    _
  $region9: #{lstm_classifier_forward.1} parent=0 // pred_fallthru
    _
  // Predicated region
  $region10: #{lstm_classifier_forward.1} parent=0 // pred_check
    _
  $region11: #{lstm_classifier_forward.1} parent=0 // pred_check_branch
    %18 = sbr.rel (0) target = $region13
  $region12: #{lstm_classifier_forward.1} parent=0 // pred_region
    _
  $region13: #{lstm_classifier_forward.1} parent=0 // pred_fallthru
    _
  // Predicated region
  $region14: #{lstm_classifier_forward.1} parent=0 // pred_check
    _
  $region15: #{lstm_classifier_forward.1} parent=0 // pred_check_branch
    %20 = sbr.rel (0) target = $region17
  $region16: #{lstm_classifier_forward.1} parent=0 // pred_region
    _
  $region17: #{lstm_classifier_forward.1} parent=0 // pred_fallthru
    _
  // Predicated region
  $region18: #{lstm_classifier_forward.1} parent=0 // pred_check
    _
  $region19: #{lstm_classifier_forward.1} parent=0 // pred_check_branch
    %22 = sbr.rel (0) target = $region21
  $region20: #{lstm_classifier_forward.1} parent=0 // pred_region
    _
  $region21: #{lstm_classifier_forward.1} parent=0 // pred_fallthru
    _
  // Predicated region
  $region22: #{lstm_classifier_forward.1} parent=0 // pred_check
    _
  $region23: #{lstm_classifier_forward.1} parent=0 // pred_check_branch
    %24 = sbr.rel (0) target = $region25
  $region24: #{lstm_classifier_forward.1} parent=0 // pred_region
    _
  $region25: #{lstm_classifier_forward.1} parent=0 // pred_fallthru
    _
  // Predicated region
  $region26: #{lstm_classifier_forward.1} parent=0 // pred_check
    _
  $region27: #{lstm_classifier_forward.1} parent=0 // pred_check_branch
    %26 = sbr.rel (0) target = $region29
  $region28: #{lstm_classifier_forward.1} parent=0 // pred_region
    _
  $region29: #{lstm_classifier_forward.1} parent=0 // pred_fallthru
    _
  // Predicated region
  $region30: #{lstm_classifier_forward.1} parent=0 // pred_check
    _
  $region31: #{lstm_classifier_forward.1} parent=0 // pred_check_branch
    %28 = sbr.rel (0) target = $region33
  $region32: #{lstm_classifier_forward.1} parent=0 // pred_region
    _
  $region33: #{lstm_classifier_forward.1} parent=0 // pred_fallthru
    _
  %v29 = vld [vmem:[%s0] sm:$0xff]
  %v30 = vld [vmem:[%s0 + $0x8] sm:$0xff]
  %v31 = vld [vmem:[%s0 + $0x10] sm:$0xff]
  %v32 = vld [vmem:[%s0 + $0x18] sm:$0xff]
  %v33 = vld [vmem:[%s0 + $0x20] sm:$0xff]
  %v34 = vld [vmem:[%s0 + $0x28] sm:$0xff]
  %v35 = vld [vmem:[%s0 + $0x30] sm:$0xff]
  %v36 = vld [vmem:[%s0 + $0x38] sm:$0xff]
  %v37 = vld [vmem:[%s1] sm:$0x77]
  %v38 = vld [vmem:[%s3] sm:$0x3]
  %v40 = vlaneseq
  %v41 = vshrl.u32 %v40, 7
  %v42 = vsub.s32 0, %v41
  %v43 = vrot.slane %v38, %v42
  %v44 = vlaneseq
  %v45 = vshrl.u32 %v44, 7
  %v46 = vsub.s32 1, %v45
  %v47 = vrot.slane %v38, %v46
  %v51 = vcombine.high %v37, %v37
  %vm52 = vcmask 23552
  %v54 = vsel %vm52, %v29, 0
  %v57 = vsel %vm52, %v30, 0
  %v60 = vsel %vm52, %v31, 0
  %v63 = vsel %vm52, %v32, 0
  %v66 = vsel %vm52, %v33, 0
  %v69 = vsel %vm52, %v34, 0
  %v72 = vsel %vm52, %v35, 0
  %v75 = vsel %vm52, %v36, 0
  %vm77 = vcmask 1042432
  %v78 = vsel %vm77, %v37, 0
  %v80 = vsel %vm77, %v51, 0
  %82 = vmatprep.subr.mxu0 0.0
  %83 = vmatpush1.msra.mxu0 0.0
  %84 = vmatprep.subr.mxu0 0.0
  %85 = vmatpush1.msra.mxu0 0.0
  %86 = vmatprep.subr.mxu0 0.0
  %87 = vmatpush1.msra.mxu0 0.0
  %88 = vmatprep.subr.mxu0 0.0
  %89 = vmatpush1.msra.mxu0 0.0
  %90 = vmatprep.subr.mxu0 0.0
  %91 = vmatpush1.msra.mxu0 0.0
  %92 = vmatprep.subr.mxu0 0.0
  %93 = vmatpush1.msra.mxu0 0.0
  %94 = vmatprep.subr.mxu0 0.0
  %95 = vmatpush1.msra.mxu0 0.0
  %96 = vmatprep.subr.mxu0 0.0
  %97 = vmatpush1.msra.mxu0 0.0
  %98 = vmatprep.subr.mxu0 0.0
  %99 = vmatpush1.msra.mxu0 0.0
  %100 = vmatprep.subr.mxu0 0.0
  %101 = vmatpush1.msra.mxu0 0.0
  %102 = vmatprep.subr.mxu0 0.0
  %103 = vmatpush1.msra.mxu0 0.0
  %104 = vmatprep.subr.mxu0 0.0
  %105 = vmatpush1.msra.mxu0 0.0
  %106 = vmatprep.subr.mxu0 0.0
  %107 = vmatpush1.msra.mxu0 0.0
  %108 = vmatprep.subr.mxu0 0.0
  %109 = vmatpush1.msra.mxu0 0.0
  %110 = vmatprep.subr.mxu0 0.0
  %111 = vmatpush1.msra.mxu0 0.0
  %112 = vmatprep.subr.mxu0 %v80
  %113 = vmatpush1.msra.mxu0 %v78
  %114 = vmatprep.subr.mxu0 0.0
  %115 = vmatpush2.msra.mxu0 0.0
  %116 = vmatprep.subr.mxu0 0.0
  %117 = vmatpush2.msra.mxu0 0.0
  %118 = vmatprep.subr.mxu0 0.0
  %119 = vmatpush2.msra.mxu0 0.0
  %120 = vmatprep.subr.mxu0 0.0
  %121 = vmatpush2.msra.mxu0 0.0
  %122 = vmatprep.subr.mxu0 0.0
  %123 = vmatpush2.msra.mxu0 0.0
  %124 = vmatprep.subr.mxu0 0.0
  %125 = vmatpush2.msra.mxu0 0.0
  %126 = vmatprep.subr.mxu0 0.0
  %127 = vmatpush2.msra.mxu0 0.0
  %128 = vmatprep.subr.mxu0 0.0
  %129 = vmatpush2.msra.mxu0 0.0
  %130 = vmatprep.subr.mxu0 0.0
  %131 = vmatpush2.msra.mxu0 0.0
  %132 = vmatprep.subr.mxu0 0.0
  %133 = vmatpush2.msra.mxu0 0.0
  %134 = vmatprep.subr.mxu0 0.0
  %135 = vmatpush2.msra.mxu0 0.0
  %136 = vmatprep.subr.mxu0 0.0
  %137 = vmatpush2.msra.mxu0 0.0
  %138 = vmatprep.subr.mxu0 0.0
  %139 = vmatpush2.msra.mxu0 0.0
  %140 = vmatprep.subr.mxu0 0.0
  %141 = vmatpush2.msra.mxu0 0.0
  %142 = vmatprep.subr.mxu0 0.0
  %143 = vmatpush2.msra.mxu0 0.0
  %144 = vmatprep.subr.mxu0 0.0
  %145 = vmatpush2.msra.mxu0 0.0
  %146 = vmatprep.mubr.f32.mxu0 0.0
  %147 = vmatmul.mubr.f32.gmra.mxu0 %v54
  %v148 = vpop.f32.mrf.mxu0
  %v149 = vadd.f32 %v43, %v148
  %v150 = vpop.f32.mrf.mxu0
  %v151 = vadd.f32 %v47, %v150
  %152 = vmatprep.mubr.f32.mxu0 0.0
  %153 = vmatmul.mubr.f32.gmra.mxu0 %v57
  %v154 = vpop.f32.mrf.mxu0
  %v155 = vadd.f32 %v43, %v154
  %v156 = vpop.f32.mrf.mxu0
  %v157 = vadd.f32 %v47, %v156
  %158 = vmatprep.mubr.f32.mxu0 0.0
  %159 = vmatmul.mubr.f32.gmra.mxu0 %v60
  %v160 = vpop.f32.mrf.mxu0
  %v161 = vadd.f32 %v43, %v160
  %v162 = vpop.f32.mrf.mxu0
  %v163 = vadd.f32 %v47, %v162
  %164 = vmatprep.mubr.f32.mxu0 0.0
  %165 = vmatmul.mubr.f32.gmra.mxu0 %v63
  %v166 = vpop.f32.mrf.mxu0
  %v167 = vadd.f32 %v43, %v166
  %v168 = vpop.f32.mrf.mxu0
  %v169 = vadd.f32 %v47, %v168
  %170 = vmatprep.mubr.f32.mxu0 0.0
  %171 = vmatmul.mubr.f32.gmra.mxu0 %v66
  %v172 = vpop.f32.mrf.mxu0
  %v173 = vadd.f32 %v43, %v172
  %v174 = vpop.f32.mrf.mxu0
  %v175 = vadd.f32 %v47, %v174
  %176 = vmatprep.mubr.f32.mxu0 0.0
  %177 = vmatmul.mubr.f32.gmra.mxu0 %v69
  %v178 = vpop.f32.mrf.mxu0
  %v179 = vadd.f32 %v43, %v178
  %v180 = vpop.f32.mrf.mxu0
  %v181 = vadd.f32 %v47, %v180
  %182 = vmatprep.mubr.f32.mxu0 0.0
  %183 = vmatmul.mubr.f32.gmra.mxu0 %v72
  %v184 = vpop.f32.mrf.mxu0
  %v185 = vadd.f32 %v43, %v184
  %v186 = vpop.f32.mrf.mxu0
  %v187 = vadd.f32 %v47, %v186
  %188 = vmatprep.mubr.f32.mxu0 0.0
  %189 = vmatmul.mubr.f32.gmra.mxu0 %v75
  %v190 = vpop.f32.mrf.mxu0
  %v191 = vadd.f32 %v43, %v190
  %v192 = vpop.f32.mrf.mxu0
  %v193 = vadd.f32 %v47, %v192
  %194 = vdwg.mxu0
  %v195 = vld [vmem:[%s2] sm:$0xff]
  %v196 = vld [vmem:[%s2 + $0x8] sm:$0xff]
  %v197 = vld [vmem:[%s2 + $0x10] sm:$0xff]
  %v198 = vld [vmem:[%s2 + $0x18] sm:$0xff]
  %v199 = vld [vmem:[%s2 + $0x20] sm:$0xff]
  %v200 = vld [vmem:[%s2 + $0x28] sm:$0xff]
  %v201 = vld [vmem:[%s2 + $0x30] sm:$0xff]
  %v202 = vld [vmem:[%s2 + $0x38] sm:$0xff]
  %v203 = vld [vmem:[%s2 + $0x40] sm:$0xff]
  %v204 = vld [vmem:[%s2 + $0x48] sm:$0xff]
  %v205 = vld [vmem:[%s2 + $0x50] sm:$0xff]
  %v206 = vld [vmem:[%s2 + $0x58] sm:$0xff]
  %v207 = vld [vmem:[%s2 + $0x60] sm:$0xff]
  %v208 = vld [vmem:[%s2 + $0x68] sm:$0xff]
  %v209 = vld [vmem:[%s2 + $0x70] sm:$0xff]
  %v210 = vld [vmem:[%s2 + $0x78] sm:$0xff]
  %vm211 = vcmask 523264
  %v213 = vsel %vm211, 0.0, 0
  %215 = vmatprep.subr.mxu0 0.0
  %216 = vmatpush1.msra.mxu0 0.0
  %217 = vmatprep.subr.mxu0 0.0
  %218 = vmatpush1.msra.mxu0 0.0
  %219 = vmatprep.subr.mxu0 0.0
  %220 = vmatpush1.msra.mxu0 0.0
  %221 = vmatprep.subr.mxu0 0.0
  %222 = vmatpush1.msra.mxu0 0.0
  %223 = vmatprep.subr.mxu0 0.0
  %224 = vmatpush1.msra.mxu0 0.0
  %225 = vmatprep.subr.mxu0 0.0
  %226 = vmatpush1.msra.mxu0 0.0
  %227 = vmatprep.subr.mxu0 0.0
  %228 = vmatpush1.msra.mxu0 0.0
  %229 = vmatprep.subr.mxu0 0.0
  %230 = vmatpush1.msra.mxu0 0.0
  %231 = vmatprep.subr.mxu0 %v210
  %232 = vmatpush1.msra.mxu0 %v209
  %233 = vmatprep.subr.mxu0 %v208
  %234 = vmatpush1.msra.mxu0 %v207
  %235 = vmatprep.subr.mxu0 %v206
  %236 = vmatpush1.msra.mxu0 %v205
  %237 = vmatprep.subr.mxu0 %v204
  %238 = vmatpush1.msra.mxu0 %v203
  %239 = vmatprep.subr.mxu0 %v202
  %240 = vmatpush1.msra.mxu0 %v201
  %241 = vmatprep.subr.mxu0 %v200
  %242 = vmatpush1.msra.mxu0 %v199
  %243 = vmatprep.subr.mxu0 %v198
  %244 = vmatpush1.msra.mxu0 %v197
  %245 = vmatprep.subr.mxu0 %v196
  %246 = vmatpush1.msra.mxu0 %v195
  %247 = vmatprep.subr.mxu0 0.0
  %248 = vmatpush2.msra.mxu0 0.0
  %249 = vmatprep.subr.mxu0 0.0
  %250 = vmatpush2.msra.mxu0 0.0
  %251 = vmatprep.subr.mxu0 0.0
  %252 = vmatpush2.msra.mxu0 0.0
  %253 = vmatprep.subr.mxu0 0.0
  %254 = vmatpush2.msra.mxu0 0.0
  %255 = vmatprep.subr.mxu0 0.0
  %256 = vmatpush2.msra.mxu0 0.0
  %257 = vmatprep.subr.mxu0 0.0
  %258 = vmatpush2.msra.mxu0 0.0
  %259 = vmatprep.subr.mxu0 0.0
  %260 = vmatpush2.msra.mxu0 0.0
  %261 = vmatprep.subr.mxu0 0.0
  %262 = vmatpush2.msra.mxu0 0.0
  %263 = vmatprep.subr.mxu0 0.0
  %264 = vmatpush2.msra.mxu0 0.0
  %265 = vmatprep.subr.mxu0 0.0
  %266 = vmatpush2.msra.mxu0 0.0
  %267 = vmatprep.subr.mxu0 0.0
  %268 = vmatpush2.msra.mxu0 0.0
  %269 = vmatprep.subr.mxu0 0.0
  %270 = vmatpush2.msra.mxu0 0.0
  %271 = vmatprep.subr.mxu0 0.0
  %272 = vmatpush2.msra.mxu0 0.0
  %273 = vmatprep.subr.mxu0 0.0
  %274 = vmatpush2.msra.mxu0 0.0
  %275 = vmatprep.subr.mxu0 0.0
  %276 = vmatpush2.msra.mxu0 0.0
  %277 = vmatprep.subr.mxu0 0.0
  %278 = vmatpush2.msra.mxu0 0.0
  %279 = vmatprep.mubr.f32.mxu0 0.0
  %280 = vmatmul.mubr.f32.gmra.mxu0 %v213
  %v281 = vpop.f32.mrf.mxu0
  %v282 = vadd.f32 0.0, %v281
  %v283 = vpop.f32.mrf.mxu0
  %v284 = vadd.f32 0.0, %v283
  %285 = vdwg.mxu0
  %v286 = vadd.f32 %v149, %v282
  %v287 = vadd.f32 %v151, %v284
  %v288 = vxor.u32 %v286, 2147483648
  %v289 = vxor.u32 %v287, 2147483648
  %v290 = vmul.f32 %v288, 1.442695
  %v291 = vpow.pop %v290
  %v292 = vmul.f32 %v289, 1.442695
  %v293 = vpow.pop %v292
  %v294 = vadd.f32 %v291, 1.0
  %v295 = vadd.f32 %v293, 1.0
  %v296 = vrcp.pop %v294
  %v297 = vmul.f32 1.0, %v296
  %v298 = vrcp.pop %v295
  %v299 = vmul.f32 1.0, %v298
  %v300 = vtanh.pop %v287
  %v301 = vmul.f32 %v297, 0.0
  %303 = vrot.lane.b32.xlu0 %v300, 64
  %v304 = vpop.permute.xlu0 %303
  %v306 = vmul.f32 %v297, %v304
  %308 = vrot.lane.b32.xlu0 %v306, 64
  %v309 = vpop.permute.xlu0 %308
  %v311 = vadd.f32 %v301, %v309
  %v312 = vtanh.pop %v311
  %314 = vrot.lane.b32.xlu0 %v312, 64
  %v315 = vpop.permute.xlu0 %314
  %v317 = vmul.f32 %v299, %v315
  %v319 = vsel %vm211, %v317, 0
  %321 = vmatprep.subr.mxu0 0.0
  %322 = vmatpush1.msra.mxu0 0.0
  %323 = vmatprep.subr.mxu0 0.0
  %324 = vmatpush1.msra.mxu0 0.0
  %325 = vmatprep.subr.mxu0 0.0
  %326 = vmatpush1.msra.mxu0 0.0
  %327 = vmatprep.subr.mxu0 0.0
  %328 = vmatpush1.msra.mxu0 0.0
  %329 = vmatprep.subr.mxu0 0.0
  %330 = vmatpush1.msra.mxu0 0.0
  %331 = vmatprep.subr.mxu0 0.0
  %332 = vmatpush1.msra.mxu0 0.0
  %333 = vmatprep.subr.mxu0 0.0
  %334 = vmatpush1.msra.mxu0 0.0
  %335 = vmatprep.subr.mxu0 0.0
  %336 = vmatpush1.msra.mxu0 0.0
  %337 = vmatprep.subr.mxu0 %v210
  %338 = vmatpush1.msra.mxu0 %v209
  %339 = vmatprep.subr.mxu0 %v208
  %340 = vmatpush1.msra.mxu0 %v207
  %341 = vmatprep.subr.mxu0 %v206
  %342 = vmatpush1.msra.mxu0 %v205
  %343 = vmatprep.subr.mxu0 %v204
  %344 = vmatpush1.msra.mxu0 %v203
  %345 = vmatprep.subr.mxu0 %v202
  %346 = vmatpush1.msra.mxu0 %v201
  %347 = vmatprep.subr.mxu0 %v200
  %348 = vmatpush1.msra.mxu0 %v199
  %349 = vmatprep.subr.mxu0 %v198
  %350 = vmatpush1.msra.mxu0 %v197
  %351 = vmatprep.subr.mxu0 %v196
  %352 = vmatpush1.msra.mxu0 %v195
  %353 = vmatprep.subr.mxu0 0.0
  %354 = vmatpush2.msra.mxu0 0.0
  %355 = vmatprep.subr.mxu0 0.0
  %356 = vmatpush2.msra.mxu0 0.0
  %357 = vmatprep.subr.mxu0 0.0
  %358 = vmatpush2.msra.mxu0 0.0
  %359 = vmatprep.subr.mxu0 0.0
  %360 = vmatpush2.msra.mxu0 0.0
  %361 = vmatprep.subr.mxu0 0.0
  %362 = vmatpush2.msra.mxu0 0.0
  %363 = vmatprep.subr.mxu0 0.0
  %364 = vmatpush2.msra.mxu0 0.0
  %365 = vmatprep.subr.mxu0 0.0
  %366 = vmatpush2.msra.mxu0 0.0
  %367 = vmatprep.subr.mxu0 0.0
  %368 = vmatpush2.msra.mxu0 0.0
  %369 = vmatprep.subr.mxu0 0.0
  %370 = vmatpush2.msra.mxu0 0.0
  %371 = vmatprep.subr.mxu0 0.0
  %372 = vmatpush2.msra.mxu0 0.0
  %373 = vmatprep.subr.mxu0 0.0
  %374 = vmatpush2.msra.mxu0 0.0
  %375 = vmatprep.subr.mxu0 0.0
  %376 = vmatpush2.msra.mxu0 0.0
  %377 = vmatprep.subr.mxu0 0.0
  %378 = vmatpush2.msra.mxu0 0.0
  %379 = vmatprep.subr.mxu0 0.0
  %380 = vmatpush2.msra.mxu0 0.0
  %381 = vmatprep.subr.mxu0 0.0
  %382 = vmatpush2.msra.mxu0 0.0
  %383 = vmatprep.subr.mxu0 0.0
  %384 = vmatpush2.msra.mxu0 0.0
  %385 = vmatprep.mubr.f32.mxu0 0.0
  %386 = vmatmul.mubr.f32.gmra.mxu0 %v319
  %v387 = vpop.f32.mrf.mxu0
  %v388 = vadd.f32 0.0, %v387
  %v389 = vpop.f32.mrf.mxu0
  %v390 = vadd.f32 0.0, %v389
  %391 = vdwg.mxu0
  %v392 = vadd.f32 %v155, %v388
  %v393 = vadd.f32 %v157, %v390
  %v394 = vxor.u32 %v392, 2147483648
  %v395 = vxor.u32 %v393, 2147483648
  %v396 = vmul.f32 %v394, 1.442695
  %v397 = vpow.pop %v396
  %v398 = vmul.f32 %v395, 1.442695
  %v399 = vpow.pop %v398
  %v400 = vadd.f32 %v397, 1.0
  %v401 = vadd.f32 %v399, 1.0
  %v402 = vrcp.pop %v400
  %v403 = vmul.f32 1.0, %v402
  %v404 = vrcp.pop %v401
  %v405 = vmul.f32 1.0, %v404
  %v406 = vtanh.pop %v393
  %v407 = vmul.f32 %v403, %v311
  %409 = vrot.lane.b32.xlu0 %v406, 64
  %v410 = vpop.permute.xlu0 %409
  %v412 = vmul.f32 %v403, %v410
  %414 = vrot.lane.b32.xlu0 %v412, 64
  %v415 = vpop.permute.xlu0 %414
  %v417 = vadd.f32 %v407, %v415
  %v418 = vtanh.pop %v417
  %420 = vrot.lane.b32.xlu0 %v418, 64
  %v421 = vpop.permute.xlu0 %420
  %v423 = vmul.f32 %v405, %v421
  %v425 = vsel %vm211, %v423, 0
  %427 = vmatprep.subr.mxu0 0.0
  %428 = vmatpush1.msra.mxu0 0.0
  %429 = vmatprep.subr.mxu0 0.0
  %430 = vmatpush1.msra.mxu0 0.0
  %431 = vmatprep.subr.mxu0 0.0
  %432 = vmatpush1.msra.mxu0 0.0
  %433 = vmatprep.subr.mxu0 0.0
  %434 = vmatpush1.msra.mxu0 0.0
  %435 = vmatprep.subr.mxu0 0.0
  %436 = vmatpush1.msra.mxu0 0.0
  %437 = vmatprep.subr.mxu0 0.0
  %438 = vmatpush1.msra.mxu0 0.0
  %439 = vmatprep.subr.mxu0 0.0
  %440 = vmatpush1.msra.mxu0 0.0
  %441 = vmatprep.subr.mxu0 0.0
  %442 = vmatpush1.msra.mxu0 0.0
  %443 = vmatprep.subr.mxu0 %v210
  %444 = vmatpush1.msra.mxu0 %v209
  %445 = vmatprep.subr.mxu0 %v208
  %446 = vmatpush1.msra.mxu0 %v207
  %447 = vmatprep.subr.mxu0 %v206
  %448 = vmatpush1.msra.mxu0 %v205
  %449 = vmatprep.subr.mxu0 %v204
  %450 = vmatpush1.msra.mxu0 %v203
  %451 = vmatprep.subr.mxu0 %v202
  %452 = vmatpush1.msra.mxu0 %v201
  %453 = vmatprep.subr.mxu0 %v200
  %454 = vmatpush1.msra.mxu0 %v199
  %455 = vmatprep.subr.mxu0 %v198
  %456 = vmatpush1.msra.mxu0 %v197
  %457 = vmatprep.subr.mxu0 %v196
  %458 = vmatpush1.msra.mxu0 %v195
  %459 = vmatprep.subr.mxu0 0.0
  %460 = vmatpush2.msra.mxu0 0.0
  %461 = vmatprep.subr.mxu0 0.0
  %462 = vmatpush2.msra.mxu0 0.0
  %463 = vmatprep.subr.mxu0 0.0
  %464 = vmatpush2.msra.mxu0 0.0
  %465 = vmatprep.subr.mxu0 0.0
  %466 = vmatpush2.msra.mxu0 0.0
  %467 = vmatprep.subr.mxu0 0.0
  %468 = vmatpush2.msra.mxu0 0.0
  %469 = vmatprep.subr.mxu0 0.0
  %470 = vmatpush2.msra.mxu0 0.0
  %471 = vmatprep.subr.mxu0 0.0
  %472 = vmatpush2.msra.mxu0 0.0
  %473 = vmatprep.subr.mxu0 0.0
  %474 = vmatpush2.msra.mxu0 0.0
  %475 = vmatprep.subr.mxu0 0.0
  %476 = vmatpush2.msra.mxu0 0.0
  %477 = vmatprep.subr.mxu0 0.0
  %478 = vmatpush2.msra.mxu0 0.0
  %479 = vmatprep.subr.mxu0 0.0
  %480 = vmatpush2.msra.mxu0 0.0
  %481 = vmatprep.subr.mxu0 0.0
  %482 = vmatpush2.msra.mxu0 0.0
  %483 = vmatprep.subr.mxu0 0.0
  %484 = vmatpush2.msra.mxu0 0.0
  %485 = vmatprep.subr.mxu0 0.0
  %486 = vmatpush2.msra.mxu0 0.0
  %487 = vmatprep.subr.mxu0 0.0
  %488 = vmatpush2.msra.mxu0 0.0
  %489 = vmatprep.subr.mxu0 0.0
  %490 = vmatpush2.msra.mxu0 0.0
  %491 = vmatprep.mubr.f32.mxu0 0.0
  %492 = vmatmul.mubr.f32.gmra.mxu0 %v425
  %v493 = vpop.f32.mrf.mxu0
  %v494 = vadd.f32 0.0, %v493
  %v495 = vpop.f32.mrf.mxu0
  %v496 = vadd.f32 0.0, %v495
  %497 = vdwg.mxu0
  %v498 = vadd.f32 %v161, %v494
  %v499 = vadd.f32 %v163, %v496
  %v500 = vxor.u32 %v498, 2147483648
  %v501 = vxor.u32 %v499, 2147483648
  %v502 = vmul.f32 %v500, 1.442695
  %v503 = vpow.pop %v502
  %v504 = vmul.f32 %v501, 1.442695
  %v505 = vpow.pop %v504
  %v506 = vadd.f32 %v503, 1.0
  %v507 = vadd.f32 %v505, 1.0
  %v508 = vrcp.pop %v506
  %v509 = vmul.f32 1.0, %v508
  %v510 = vrcp.pop %v507
  %v511 = vmul.f32 1.0, %v510
  %v512 = vtanh.pop %v499
  %v513 = vmul.f32 %v509, %v417
  %515 = vrot.lane.b32.xlu0 %v512, 64
  %v516 = vpop.permute.xlu0 %515
  %v518 = vmul.f32 %v509, %v516
  %520 = vrot.lane.b32.xlu0 %v518, 64
  %v521 = vpop.permute.xlu0 %520
  %v523 = vadd.f32 %v513, %v521
  %v524 = vtanh.pop %v523
  %526 = vrot.lane.b32.xlu0 %v524, 64
  %v527 = vpop.permute.xlu0 %526
  %v529 = vmul.f32 %v511, %v527
  %v531 = vsel %vm211, %v529, 0
  %533 = vmatprep.subr.mxu0 0.0
  %534 = vmatpush1.msra.mxu0 0.0
  %535 = vmatprep.subr.mxu0 0.0
  %536 = vmatpush1.msra.mxu0 0.0
  %537 = vmatprep.subr.mxu0 0.0
  %538 = vmatpush1.msra.mxu0 0.0
  %539 = vmatprep.subr.mxu0 0.0
  %540 = vmatpush1.msra.mxu0 0.0
  %541 = vmatprep.subr.mxu0 0.0
  %542 = vmatpush1.msra.mxu0 0.0
  %543 = vmatprep.subr.mxu0 0.0
  %544 = vmatpush1.msra.mxu0 0.0
  %545 = vmatprep.subr.mxu0 0.0
  %546 = vmatpush1.msra.mxu0 0.0
  %547 = vmatprep.subr.mxu0 0.0
  %548 = vmatpush1.msra.mxu0 0.0
  %549 = vmatprep.subr.mxu0 %v210
  %550 = vmatpush1.msra.mxu0 %v209
  %551 = vmatprep.subr.mxu0 %v208
  %552 = vmatpush1.msra.mxu0 %v207
  %553 = vmatprep.subr.mxu0 %v206
  %554 = vmatpush1.msra.mxu0 %v205
  %555 = vmatprep.subr.mxu0 %v204
  %556 = vmatpush1.msra.mxu0 %v203
  %557 = vmatprep.subr.mxu0 %v202
  %558 = vmatpush1.msra.mxu0 %v201
  %559 = vmatprep.subr.mxu0 %v200
  %560 = vmatpush1.msra.mxu0 %v199
  %561 = vmatprep.subr.mxu0 %v198
  %562 = vmatpush1.msra.mxu0 %v197
  %563 = vmatprep.subr.mxu0 %v196
  %564 = vmatpush1.msra.mxu0 %v195
  %565 = vmatprep.subr.mxu0 0.0
  %566 = vmatpush2.msra.mxu0 0.0
  %567 = vmatprep.subr.mxu0 0.0
  %568 = vmatpush2.msra.mxu0 0.0
  %569 = vmatprep.subr.mxu0 0.0
  %570 = vmatpush2.msra.mxu0 0.0
  %571 = vmatprep.subr.mxu0 0.0
  %572 = vmatpush2.msra.mxu0 0.0
  %573 = vmatprep.subr.mxu0 0.0
  %574 = vmatpush2.msra.mxu0 0.0
  %575 = vmatprep.subr.mxu0 0.0
  %576 = vmatpush2.msra.mxu0 0.0
  %577 = vmatprep.subr.mxu0 0.0
  %578 = vmatpush2.msra.mxu0 0.0
  %579 = vmatprep.subr.mxu0 0.0
  %580 = vmatpush2.msra.mxu0 0.0
  %581 = vmatprep.subr.mxu0 0.0
  %582 = vmatpush2.msra.mxu0 0.0
  %583 = vmatprep.subr.mxu0 0.0
  %584 = vmatpush2.msra.mxu0 0.0
  %585 = vmatprep.subr.mxu0 0.0
  %586 = vmatpush2.msra.mxu0 0.0
  %587 = vmatprep.subr.mxu0 0.0
  %588 = vmatpush2.msra.mxu0 0.0
  %589 = vmatprep.subr.mxu0 0.0
  %590 = vmatpush2.msra.mxu0 0.0
  %591 = vmatprep.subr.mxu0 0.0
  %592 = vmatpush2.msra.mxu0 0.0
  %593 = vmatprep.subr.mxu0 0.0
  %594 = vmatpush2.msra.mxu0 0.0
  %595 = vmatprep.subr.mxu0 0.0
  %596 = vmatpush2.msra.mxu0 0.0
  %597 = vmatprep.mubr.f32.mxu0 0.0
  %598 = vmatmul.mubr.f32.gmra.mxu0 %v531
  %v599 = vpop.f32.mrf.mxu0
  %v600 = vadd.f32 0.0, %v599
  %v601 = vpop.f32.mrf.mxu0
  %v602 = vadd.f32 0.0, %v601
  %603 = vdwg.mxu0
  %v604 = vadd.f32 %v167, %v600
  %v605 = vadd.f32 %v169, %v602
  %v606 = vxor.u32 %v604, 2147483648
  %v607 = vxor.u32 %v605, 2147483648
  %v608 = vmul.f32 %v606, 1.442695
  %v609 = vpow.pop %v608
  %v610 = vmul.f32 %v607, 1.442695
  %v611 = vpow.pop %v610
  %v612 = vadd.f32 %v609, 1.0
  %v613 = vadd.f32 %v611, 1.0
  %v614 = vrcp.pop %v612
  %v615 = vmul.f32 1.0, %v614
  %v616 = vrcp.pop %v613
  %v617 = vmul.f32 1.0, %v616
  %v618 = vtanh.pop %v605
  %v619 = vmul.f32 %v615, %v523
  %621 = vrot.lane.b32.xlu0 %v618, 64
  %v622 = vpop.permute.xlu0 %621
  %v624 = vmul.f32 %v615, %v622
  %626 = vrot.lane.b32.xlu0 %v624, 64
  %v627 = vpop.permute.xlu0 %626
  %v629 = vadd.f32 %v619, %v627
  %v630 = vtanh.pop %v629
  %632 = vrot.lane.b32.xlu0 %v630, 64
  %v633 = vpop.permute.xlu0 %632
  %v635 = vmul.f32 %v617, %v633
  %v637 = vsel %vm211, %v635, 0
  %639 = vmatprep.subr.mxu0 0.0
  %640 = vmatpush1.msra.mxu0 0.0
  %641 = vmatprep.subr.mxu0 0.0
  %642 = vmatpush1.msra.mxu0 0.0
  %643 = vmatprep.subr.mxu0 0.0
  %644 = vmatpush1.msra.mxu0 0.0
  %645 = vmatprep.subr.mxu0 0.0
  %646 = vmatpush1.msra.mxu0 0.0
  %647 = vmatprep.subr.mxu0 0.0
  %648 = vmatpush1.msra.mxu0 0.0
  %649 = vmatprep.subr.mxu0 0.0
  %650 = vmatpush1.msra.mxu0 0.0
  %651 = vmatprep.subr.mxu0 0.0
  %652 = vmatpush1.msra.mxu0 0.0
  %653 = vmatprep.subr.mxu0 0.0
  %654 = vmatpush1.msra.mxu0 0.0
  %655 = vmatprep.subr.mxu0 %v210
  %656 = vmatpush1.msra.mxu0 %v209
  %657 = vmatprep.subr.mxu0 %v208
  %658 = vmatpush1.msra.mxu0 %v207
  %659 = vmatprep.subr.mxu0 %v206
  %660 = vmatpush1.msra.mxu0 %v205
  %661 = vmatprep.subr.mxu0 %v204
  %662 = vmatpush1.msra.mxu0 %v203
  %663 = vmatprep.subr.mxu0 %v202
  %664 = vmatpush1.msra.mxu0 %v201
  %665 = vmatprep.subr.mxu0 %v200
  %666 = vmatpush1.msra.mxu0 %v199
  %667 = vmatprep.subr.mxu0 %v198
  %668 = vmatpush1.msra.mxu0 %v197
  %669 = vmatprep.subr.mxu0 %v196
  %670 = vmatpush1.msra.mxu0 %v195
  %671 = vmatprep.subr.mxu0 0.0
  %672 = vmatpush2.msra.mxu0 0.0
  %673 = vmatprep.subr.mxu0 0.0
  %674 = vmatpush2.msra.mxu0 0.0
  %675 = vmatprep.subr.mxu0 0.0
  %676 = vmatpush2.msra.mxu0 0.0
  %677 = vmatprep.subr.mxu0 0.0
  %678 = vmatpush2.msra.mxu0 0.0
  %679 = vmatprep.subr.mxu0 0.0
  %680 = vmatpush2.msra.mxu0 0.0
  %681 = vmatprep.subr.mxu0 0.0
  %682 = vmatpush2.msra.mxu0 0.0
  %683 = vmatprep.subr.mxu0 0.0
  %684 = vmatpush2.msra.mxu0 0.0
  %685 = vmatprep.subr.mxu0 0.0
  %686 = vmatpush2.msra.mxu0 0.0
  %687 = vmatprep.subr.mxu0 0.0
  %688 = vmatpush2.msra.mxu0 0.0
  %689 = vmatprep.subr.mxu0 0.0
  %690 = vmatpush2.msra.mxu0 0.0
  %691 = vmatprep.subr.mxu0 0.0
  %692 = vmatpush2.msra.mxu0 0.0
  %693 = vmatprep.subr.mxu0 0.0
  %694 = vmatpush2.msra.mxu0 0.0
  %695 = vmatprep.subr.mxu0 0.0
  %696 = vmatpush2.msra.mxu0 0.0
  %697 = vmatprep.subr.mxu0 0.0
  %698 = vmatpush2.msra.mxu0 0.0
  %699 = vmatprep.subr.mxu0 0.0
  %700 = vmatpush2.msra.mxu0 0.0
  %701 = vmatprep.subr.mxu0 0.0
  %702 = vmatpush2.msra.mxu0 0.0
  %703 = vmatprep.mubr.f32.mxu0 0.0
  %704 = vmatmul.mubr.f32.gmra.mxu0 %v637
  %v705 = vpop.f32.mrf.mxu0
  %v706 = vadd.f32 0.0, %v705
  %v707 = vpop.f32.mrf.mxu0
  %v708 = vadd.f32 0.0, %v707
  %709 = vdwg.mxu0
  %v710 = vadd.f32 %v173, %v706
  %v711 = vadd.f32 %v175, %v708
  %v712 = vxor.u32 %v710, 2147483648
  %v713 = vxor.u32 %v711, 2147483648
  %v714 = vmul.f32 %v712, 1.442695
  %v715 = vpow.pop %v714
  %v716 = vmul.f32 %v713, 1.442695
  %v717 = vpow.pop %v716
  %v718 = vadd.f32 %v715, 1.0
  %v719 = vadd.f32 %v717, 1.0
  %v720 = vrcp.pop %v718
  %v721 = vmul.f32 1.0, %v720
  %v722 = vrcp.pop %v719
  %v723 = vmul.f32 1.0, %v722
  %v724 = vtanh.pop %v711
  %v725 = vmul.f32 %v721, %v629
  %727 = vrot.lane.b32.xlu0 %v724, 64
  %v728 = vpop.permute.xlu0 %727
  %v730 = vmul.f32 %v721, %v728
  %732 = vrot.lane.b32.xlu0 %v730, 64
  %v733 = vpop.permute.xlu0 %732
  %v735 = vadd.f32 %v725, %v733
  %v736 = vtanh.pop %v735
  %738 = vrot.lane.b32.xlu0 %v736, 64
  %v739 = vpop.permute.xlu0 %738
  %v741 = vmul.f32 %v723, %v739
  %v743 = vsel %vm211, %v741, 0
  %745 = vmatprep.subr.mxu0 0.0
  %746 = vmatpush1.msra.mxu0 0.0
  %747 = vmatprep.subr.mxu0 0.0
  %748 = vmatpush1.msra.mxu0 0.0
  %749 = vmatprep.subr.mxu0 0.0
  %750 = vmatpush1.msra.mxu0 0.0
  %751 = vmatprep.subr.mxu0 0.0
  %752 = vmatpush1.msra.mxu0 0.0
  %753 = vmatprep.subr.mxu0 0.0
  %754 = vmatpush1.msra.mxu0 0.0
  %755 = vmatprep.subr.mxu0 0.0
  %756 = vmatpush1.msra.mxu0 0.0
  %757 = vmatprep.subr.mxu0 0.0
  %758 = vmatpush1.msra.mxu0 0.0
  %759 = vmatprep.subr.mxu0 0.0
  %760 = vmatpush1.msra.mxu0 0.0
  %761 = vmatprep.subr.mxu0 %v210
  %762 = vmatpush1.msra.mxu0 %v209
  %763 = vmatprep.subr.mxu0 %v208
  %764 = vmatpush1.msra.mxu0 %v207
  %765 = vmatprep.subr.mxu0 %v206
  %766 = vmatpush1.msra.mxu0 %v205
  %767 = vmatprep.subr.mxu0 %v204
  %768 = vmatpush1.msra.mxu0 %v203
  %769 = vmatprep.subr.mxu0 %v202
  %770 = vmatpush1.msra.mxu0 %v201
  %771 = vmatprep.subr.mxu0 %v200
  %772 = vmatpush1.msra.mxu0 %v199
  %773 = vmatprep.subr.mxu0 %v198
  %774 = vmatpush1.msra.mxu0 %v197
  %775 = vmatprep.subr.mxu0 %v196
  %776 = vmatpush1.msra.mxu0 %v195
  %777 = vmatprep.subr.mxu0 0.0
  %778 = vmatpush2.msra.mxu0 0.0
  %779 = vmatprep.subr.mxu0 0.0
  %780 = vmatpush2.msra.mxu0 0.0
  %781 = vmatprep.subr.mxu0 0.0
  %782 = vmatpush2.msra.mxu0 0.0
  %783 = vmatprep.subr.mxu0 0.0
  %784 = vmatpush2.msra.mxu0 0.0
  %785 = vmatprep.subr.mxu0 0.0
  %786 = vmatpush2.msra.mxu0 0.0
  %787 = vmatprep.subr.mxu0 0.0
  %788 = vmatpush2.msra.mxu0 0.0
  %789 = vmatprep.subr.mxu0 0.0
  %790 = vmatpush2.msra.mxu0 0.0
  %791 = vmatprep.subr.mxu0 0.0
  %792 = vmatpush2.msra.mxu0 0.0
  %793 = vmatprep.subr.mxu0 0.0
  %794 = vmatpush2.msra.mxu0 0.0
  %795 = vmatprep.subr.mxu0 0.0
  %796 = vmatpush2.msra.mxu0 0.0
  %797 = vmatprep.subr.mxu0 0.0
  %798 = vmatpush2.msra.mxu0 0.0
  %799 = vmatprep.subr.mxu0 0.0
  %800 = vmatpush2.msra.mxu0 0.0
  %801 = vmatprep.subr.mxu0 0.0
  %802 = vmatpush2.msra.mxu0 0.0
  %803 = vmatprep.subr.mxu0 0.0
  %804 = vmatpush2.msra.mxu0 0.0
  %805 = vmatprep.subr.mxu0 0.0
  %806 = vmatpush2.msra.mxu0 0.0
  %807 = vmatprep.subr.mxu0 0.0
  %808 = vmatpush2.msra.mxu0 0.0
  %809 = vmatprep.mubr.f32.mxu0 0.0
  %810 = vmatmul.mubr.f32.gmra.mxu0 %v743
  %v811 = vpop.f32.mrf.mxu0
  %v812 = vadd.f32 0.0, %v811
  %v813 = vpop.f32.mrf.mxu0
  %v814 = vadd.f32 0.0, %v813
  %815 = vdwg.mxu0
  %v816 = vadd.f32 %v179, %v812
  %v817 = vadd.f32 %v181, %v814
  %v818 = vxor.u32 %v816, 2147483648
  %v819 = vxor.u32 %v817, 2147483648
  %v820 = vmul.f32 %v818, 1.442695
  %v821 = vpow.pop %v820
  %v822 = vmul.f32 %v819, 1.442695
  %v823 = vpow.pop %v822
  %v824 = vadd.f32 %v821, 1.0
  %v825 = vadd.f32 %v823, 1.0
  %v826 = vrcp.pop %v824
  %v827 = vmul.f32 1.0, %v826
  %v828 = vrcp.pop %v825
  %v829 = vmul.f32 1.0, %v828
  %v830 = vtanh.pop %v817
  %v831 = vmul.f32 %v827, %v735
  %833 = vrot.lane.b32.xlu0 %v830, 64
  %v834 = vpop.permute.xlu0 %833
  %v836 = vmul.f32 %v827, %v834
  %838 = vrot.lane.b32.xlu0 %v836, 64
  %v839 = vpop.permute.xlu0 %838
  %v841 = vadd.f32 %v831, %v839
  %v842 = vtanh.pop %v841
  %844 = vrot.lane.b32.xlu0 %v842, 64
  %v845 = vpop.permute.xlu0 %844
  %v847 = vmul.f32 %v829, %v845
  %v849 = vsel %vm211, %v847, 0
  %851 = vmatprep.subr.mxu0 0.0
  %852 = vmatpush1.msra.mxu0 0.0
  %853 = vmatprep.subr.mxu0 0.0
  %854 = vmatpush1.msra.mxu0 0.0
  %855 = vmatprep.subr.mxu0 0.0
  %856 = vmatpush1.msra.mxu0 0.0
  %857 = vmatprep.subr.mxu0 0.0
  %858 = vmatpush1.msra.mxu0 0.0
  %859 = vmatprep.subr.mxu0 0.0
  %860 = vmatpush1.msra.mxu0 0.0
  %861 = vmatprep.subr.mxu0 0.0
  %862 = vmatpush1.msra.mxu0 0.0
  %863 = vmatprep.subr.mxu0 0.0
  %864 = vmatpush1.msra.mxu0 0.0
  %865 = vmatprep.subr.mxu0 0.0
  %866 = vmatpush1.msra.mxu0 0.0
  %867 = vmatprep.subr.mxu0 %v210
  %868 = vmatpush1.msra.mxu0 %v209
  %869 = vmatprep.subr.mxu0 %v208
  %870 = vmatpush1.msra.mxu0 %v207
  %871 = vmatprep.subr.mxu0 %v206
  %872 = vmatpush1.msra.mxu0 %v205
  %873 = vmatprep.subr.mxu0 %v204
  %874 = vmatpush1.msra.mxu0 %v203
  %875 = vmatprep.subr.mxu0 %v202
  %876 = vmatpush1.msra.mxu0 %v201
  %877 = vmatprep.subr.mxu0 %v200
  %878 = vmatpush1.msra.mxu0 %v199
  %879 = vmatprep.subr.mxu0 %v198
  %880 = vmatpush1.msra.mxu0 %v197
  %881 = vmatprep.subr.mxu0 %v196
  %882 = vmatpush1.msra.mxu0 %v195
  %883 = vmatprep.subr.mxu0 0.0
  %884 = vmatpush2.msra.mxu0 0.0
  %885 = vmatprep.subr.mxu0 0.0
  %886 = vmatpush2.msra.mxu0 0.0
  %887 = vmatprep.subr.mxu0 0.0
  %888 = vmatpush2.msra.mxu0 0.0
  %889 = vmatprep.subr.mxu0 0.0
  %890 = vmatpush2.msra.mxu0 0.0
  %891 = vmatprep.subr.mxu0 0.0
  %892 = vmatpush2.msra.mxu0 0.0
  %893 = vmatprep.subr.mxu0 0.0
  %894 = vmatpush2.msra.mxu0 0.0
  %895 = vmatprep.subr.mxu0 0.0
  %896 = vmatpush2.msra.mxu0 0.0
  %897 = vmatprep.subr.mxu0 0.0
  %898 = vmatpush2.msra.mxu0 0.0
  %899 = vmatprep.subr.mxu0 0.0
  %900 = vmatpush2.msra.mxu0 0.0
  %901 = vmatprep.subr.mxu0 0.0
  %902 = vmatpush2.msra.mxu0 0.0
  %903 = vmatprep.subr.mxu0 0.0
  %904 = vmatpush2.msra.mxu0 0.0
  %905 = vmatprep.subr.mxu0 0.0
  %906 = vmatpush2.msra.mxu0 0.0
  %907 = vmatprep.subr.mxu0 0.0
  %908 = vmatpush2.msra.mxu0 0.0
  %909 = vmatprep.subr.mxu0 0.0
  %910 = vmatpush2.msra.mxu0 0.0
  %911 = vmatprep.subr.mxu0 0.0
  %912 = vmatpush2.msra.mxu0 0.0
  %913 = vmatprep.subr.mxu0 0.0
  %914 = vmatpush2.msra.mxu0 0.0
  %915 = vmatprep.mubr.f32.mxu0 0.0
  %916 = vmatmul.mubr.f32.gmra.mxu0 %v849
  %v917 = vpop.f32.mrf.mxu0
  %v918 = vadd.f32 0.0, %v917
  %v919 = vpop.f32.mrf.mxu0
  %v920 = vadd.f32 0.0, %v919
  %921 = vdwg.mxu0
  %v922 = vadd.f32 %v185, %v918
  %v923 = vadd.f32 %v187, %v920
  %v924 = vxor.u32 %v922, 2147483648
  %v925 = vxor.u32 %v923, 2147483648
  %v926 = vmul.f32 %v924, 1.442695
  %v927 = vpow.pop %v926
  %v928 = vmul.f32 %v925, 1.442695
  %v929 = vpow.pop %v928
  %v930 = vadd.f32 %v927, 1.0
  %v931 = vadd.f32 %v929, 1.0
  %v932 = vrcp.pop %v930
  %v933 = vmul.f32 1.0, %v932
  %v934 = vrcp.pop %v931
  %v935 = vmul.f32 1.0, %v934
  %v936 = vtanh.pop %v923
  %v937 = vmul.f32 %v933, %v841
  %939 = vrot.lane.b32.xlu0 %v936, 64
  %v940 = vpop.permute.xlu0 %939
  %v942 = vmul.f32 %v933, %v940
  %944 = vrot.lane.b32.xlu0 %v942, 64
  %v945 = vpop.permute.xlu0 %944
  %v947 = vadd.f32 %v937, %v945
  %v948 = vtanh.pop %v947
  %950 = vrot.lane.b32.xlu0 %v948, 64
  %v951 = vpop.permute.xlu0 %950
  %v953 = vmul.f32 %v935, %v951
  %v955 = vsel %vm211, %v953, 0
  %957 = vmatprep.subr.mxu0 0.0
  %958 = vmatpush1.msra.mxu0 0.0
  %959 = vmatprep.subr.mxu0 0.0
  %960 = vmatpush1.msra.mxu0 0.0
  %961 = vmatprep.subr.mxu0 0.0
  %962 = vmatpush1.msra.mxu0 0.0
  %963 = vmatprep.subr.mxu0 0.0
  %964 = vmatpush1.msra.mxu0 0.0
  %965 = vmatprep.subr.mxu0 0.0
  %966 = vmatpush1.msra.mxu0 0.0
  %967 = vmatprep.subr.mxu0 0.0
  %968 = vmatpush1.msra.mxu0 0.0
  %969 = vmatprep.subr.mxu0 0.0
  %970 = vmatpush1.msra.mxu0 0.0
  %971 = vmatprep.subr.mxu0 0.0
  %972 = vmatpush1.msra.mxu0 0.0
  %973 = vmatprep.subr.mxu0 %v210
  %974 = vmatpush1.msra.mxu0 %v209
  %975 = vmatprep.subr.mxu0 %v208
  %976 = vmatpush1.msra.mxu0 %v207
  %977 = vmatprep.subr.mxu0 %v206
  %978 = vmatpush1.msra.mxu0 %v205
  %979 = vmatprep.subr.mxu0 %v204
  %980 = vmatpush1.msra.mxu0 %v203
  %981 = vmatprep.subr.mxu0 %v202
  %982 = vmatpush1.msra.mxu0 %v201
  %983 = vmatprep.subr.mxu0 %v200
  %984 = vmatpush1.msra.mxu0 %v199
  %985 = vmatprep.subr.mxu0 %v198
  %986 = vmatpush1.msra.mxu0 %v197
  %987 = vmatprep.subr.mxu0 %v196
  %988 = vmatpush1.msra.mxu0 %v195
  %989 = vmatprep.subr.mxu0 0.0
  %990 = vmatpush2.msra.mxu0 0.0
  %991 = vmatprep.subr.mxu0 0.0
  %992 = vmatpush2.msra.mxu0 0.0
  %993 = vmatprep.subr.mxu0 0.0
  %994 = vmatpush2.msra.mxu0 0.0
  %995 = vmatprep.subr.mxu0 0.0
  %996 = vmatpush2.msra.mxu0 0.0
  %997 = vmatprep.subr.mxu0 0.0
  %998 = vmatpush2.msra.mxu0 0.0
  %999 = vmatprep.subr.mxu0 0.0
  %1000 = vmatpush2.msra.mxu0 0.0
  %1001 = vmatprep.subr.mxu0 0.0
  %1002 = vmatpush2.msra.mxu0 0.0
  %1003 = vmatprep.subr.mxu0 0.0
  %1004 = vmatpush2.msra.mxu0 0.0
  %1005 = vmatprep.subr.mxu0 0.0
  %1006 = vmatpush2.msra.mxu0 0.0
  %1007 = vmatprep.subr.mxu0 0.0
  %1008 = vmatpush2.msra.mxu0 0.0
  %1009 = vmatprep.subr.mxu0 0.0
  %1010 = vmatpush2.msra.mxu0 0.0
  %1011 = vmatprep.subr.mxu0 0.0
  %1012 = vmatpush2.msra.mxu0 0.0
  %1013 = vmatprep.subr.mxu0 0.0
  %1014 = vmatpush2.msra.mxu0 0.0
  %1015 = vmatprep.subr.mxu0 0.0
  %1016 = vmatpush2.msra.mxu0 0.0
  %1017 = vmatprep.subr.mxu0 0.0
  %1018 = vmatpush2.msra.mxu0 0.0
  %1019 = vmatprep.subr.mxu0 0.0
  %1020 = vmatpush2.msra.mxu0 0.0
  %1021 = vmatprep.mubr.f32.mxu0 0.0
  %1022 = vmatmul.mubr.f32.gmra.mxu0 %v955
  %v1023 = vpop.f32.mrf.mxu0
  %v1024 = vadd.f32 0.0, %v1023
  %v1025 = vpop.f32.mrf.mxu0
  %v1026 = vadd.f32 0.0, %v1025
  %1027 = vdwg.mxu0
  %v1028 = vadd.f32 %v191, %v1024
  %v1029 = vadd.f32 %v193, %v1026
  %v1030 = vxor.u32 %v1028, 2147483648
  %v1031 = vxor.u32 %v1029, 2147483648
  %v1032 = vmul.f32 %v1030, 1.442695
  %v1033 = vpow.pop %v1032
  %v1034 = vmul.f32 %v1031, 1.442695
  %v1035 = vpow.pop %v1034
  %v1036 = vadd.f32 %v1033, 1.0
  %v1037 = vadd.f32 %v1035, 1.0
  %v1038 = vrcp.pop %v1036
  %v1039 = vmul.f32 1.0, %v1038
  %v1040 = vrcp.pop %v1037
  %v1041 = vmul.f32 1.0, %v1040
  %v1042 = vtanh.pop %v1029
  %v1043 = vmul.f32 %v1039, %v947
  %1045 = vrot.lane.b32.xlu0 %v1042, 64
  %v1046 = vpop.permute.xlu0 %1045
  %v1048 = vmul.f32 %v1039, %v1046
  %1050 = vrot.lane.b32.xlu0 %v1048, 64
  %v1051 = vpop.permute.xlu0 %1050
  %v1053 = vadd.f32 %v1043, %v1051
  %v1054 = vtanh.pop %v1053
  %1056 = vrot.lane.b32.xlu0 %v1054, 64
  %v1057 = vpop.permute.xlu0 %1056
  %v1059 = vmul.f32 %v1041, %v1057
  %v1060 = vld [vmem:[%s4] sm:$0xff]
  %v1061 = vld [vmem:[%s4 + $0x8] sm:$0xff]
  %v1062 = vld [vmem:[%s4 + $0x10] sm:$0xff]
  %v1063 = vld [vmem:[%s4 + $0x18] sm:$0xff]
  %v1064 = vld [vmem:[%s4 + $0x20] sm:$0xff]
  %v1065 = vld [vmem:[%s4 + $0x28] sm:$0xff]
  %v1066 = vld [vmem:[%s4 + $0x30] sm:$0xff]
  %v1067 = vld [vmem:[%s4 + $0x38] sm:$0xff]
  %v1068 = vld [vmem:[%s5] sm:$0x1]
  %v1070 = vlaneseq
  %v1071 = vshrl.u32 %v1070, 7
  %v1072 = vsub.s32 0, %v1071
  %v1073 = vrot.slane %v1068, %v1072
  %v1076 = vsel %vm211, %v1059, 0
  %1078 = vmatprep.subr.mxu0 0.0
  %1079 = vmatpush1.msra.mxu0 0.0
  %1080 = vmatprep.subr.mxu0 0.0
  %1081 = vmatpush1.msra.mxu0 0.0
  %1082 = vmatprep.subr.mxu0 0.0
  %1083 = vmatpush1.msra.mxu0 0.0
  %1084 = vmatprep.subr.mxu0 0.0
  %1085 = vmatpush1.msra.mxu0 0.0
  %1086 = vmatprep.subr.mxu0 0.0
  %1087 = vmatpush1.msra.mxu0 0.0
  %1088 = vmatprep.subr.mxu0 0.0
  %1089 = vmatpush1.msra.mxu0 0.0
  %1090 = vmatprep.subr.mxu0 0.0
  %1091 = vmatpush1.msra.mxu0 0.0
  %1092 = vmatprep.subr.mxu0 0.0
  %1093 = vmatpush1.msra.mxu0 0.0
  %1094 = vmatprep.subr.mxu0 0.0
  %1095 = vmatpush1.msra.mxu0 %v1067
  %1096 = vmatprep.subr.mxu0 0.0
  %1097 = vmatpush1.msra.mxu0 %v1066
  %1098 = vmatprep.subr.mxu0 0.0
  %1099 = vmatpush1.msra.mxu0 %v1065
  %1100 = vmatprep.subr.mxu0 0.0
  %1101 = vmatpush1.msra.mxu0 %v1064
  %1102 = vmatprep.subr.mxu0 0.0
  %1103 = vmatpush1.msra.mxu0 %v1063
  %1104 = vmatprep.subr.mxu0 0.0
  %1105 = vmatpush1.msra.mxu0 %v1062
  %1106 = vmatprep.subr.mxu0 0.0
  %1107 = vmatpush1.msra.mxu0 %v1061
  %1108 = vmatprep.subr.mxu0 0.0
  %1109 = vmatpush1.msra.mxu0 %v1060
  %1110 = vmatprep.subr.mxu0 0.0
  %1111 = vmatpush2.msra.mxu0 0.0
  %1112 = vmatprep.subr.mxu0 0.0
  %1113 = vmatpush2.msra.mxu0 0.0
  %1114 = vmatprep.subr.mxu0 0.0
  %1115 = vmatpush2.msra.mxu0 0.0
  %1116 = vmatprep.subr.mxu0 0.0
  %1117 = vmatpush2.msra.mxu0 0.0
  %1118 = vmatprep.subr.mxu0 0.0
  %1119 = vmatpush2.msra.mxu0 0.0
  %1120 = vmatprep.subr.mxu0 0.0
  %1121 = vmatpush2.msra.mxu0 0.0
  %1122 = vmatprep.subr.mxu0 0.0
  %1123 = vmatpush2.msra.mxu0 0.0
  %1124 = vmatprep.subr.mxu0 0.0
  %1125 = vmatpush2.msra.mxu0 0.0
  %1126 = vmatprep.subr.mxu0 0.0
  %1127 = vmatpush2.msra.mxu0 0.0
  %1128 = vmatprep.subr.mxu0 0.0
  %1129 = vmatpush2.msra.mxu0 0.0
  %1130 = vmatprep.subr.mxu0 0.0
  %1131 = vmatpush2.msra.mxu0 0.0
  %1132 = vmatprep.subr.mxu0 0.0
  %1133 = vmatpush2.msra.mxu0 0.0
  %1134 = vmatprep.subr.mxu0 0.0
  %1135 = vmatpush2.msra.mxu0 0.0
  %1136 = vmatprep.subr.mxu0 0.0
  %1137 = vmatpush2.msra.mxu0 0.0
  %1138 = vmatprep.subr.mxu0 0.0
  %1139 = vmatpush2.msra.mxu0 0.0
  %1140 = vmatprep.subr.mxu0 0.0
  %1141 = vmatpush2.msra.mxu0 0.0
  %1142 = vmatprep.mubr.f32.mxu0 0.0
  %1143 = vmatmul.mubr.f32.gmra.mxu0 %v1076
  %v1144 = vpop.f32.mrf.mxu0
  %v1145 = vadd.f32 %v1073, %v1144
  %v1146 = vpop.f32.mrf.mxu0
  %1147 = vdwg.mxu0
  %v1148 = vmax.f32 %v1145, 0.0
  %v1149 = vld [vmem:[%s6] sm:$0xff]
  %v1150 = vld [vmem:[%s6 + $0x8] sm:$0xff]
  %v1151 = vld [vmem:[%s6 + $0x10] sm:$0xff]
  %v1152 = vld [vmem:[%s6 + $0x18] sm:$0xff]
  %v1153 = vld [vmem:[%s6 + $0x20] sm:$0xff]
  %v1154 = vld [vmem:[%s6 + $0x28] sm:$0xff]
  %v1155 = vld [vmem:[%s6 + $0x30] sm:$0xff]
  %v1156 = vld [vmem:[%s6 + $0x38] sm:$0xff]
  %v1157 = vld [vmem:[%s6 + $0x40] sm:$0xff]
  %v1158 = vld [vmem:[%s6 + $0x48] sm:$0xff]
  %v1159 = vld [vmem:[%s6 + $0x50] sm:$0xff]
  %v1160 = vld [vmem:[%s6 + $0x58] sm:$0xff]
  %v1161 = vld [vmem:[%s6 + $0x60] sm:$0xff]
  %v1162 = vld [vmem:[%s6 + $0x68] sm:$0xff]
  %v1163 = vld [vmem:[%s6 + $0x70] sm:$0xff]
  %v1164 = vld [vmem:[%s6 + $0x78] sm:$0xff]
  %v1165 = vld [vmem:[%s7] sm:$0x1]
  %v1167 = vlaneseq
  %v1168 = vshrl.u32 %v1167, 7
  %v1169 = vsub.s32 0, %v1168
  %v1170 = vrot.slane %v1165, %v1169
  %1172 = vmatprep.subr.mxu0 0.0
  %1173 = vmatpush1.msra.mxu0 %v1164
  %1174 = vmatprep.subr.mxu0 0.0
  %1175 = vmatpush1.msra.mxu0 %v1163
  %1176 = vmatprep.subr.mxu0 0.0
  %1177 = vmatpush1.msra.mxu0 %v1162
  %1178 = vmatprep.subr.mxu0 0.0
  %1179 = vmatpush1.msra.mxu0 %v1161
  %1180 = vmatprep.subr.mxu0 0.0
  %1181 = vmatpush1.msra.mxu0 %v1160
  %1182 = vmatprep.subr.mxu0 0.0
  %1183 = vmatpush1.msra.mxu0 %v1159
  %1184 = vmatprep.subr.mxu0 0.0
  %1185 = vmatpush1.msra.mxu0 %v1158
  %1186 = vmatprep.subr.mxu0 0.0
  %1187 = vmatpush1.msra.mxu0 %v1157
  %1188 = vmatprep.subr.mxu0 0.0
  %1189 = vmatpush1.msra.mxu0 %v1156
  %1190 = vmatprep.subr.mxu0 0.0
  %1191 = vmatpush1.msra.mxu0 %v1155
  %1192 = vmatprep.subr.mxu0 0.0
  %1193 = vmatpush1.msra.mxu0 %v1154
  %1194 = vmatprep.subr.mxu0 0.0
  %1195 = vmatpush1.msra.mxu0 %v1153
  %1196 = vmatprep.subr.mxu0 0.0
  %1197 = vmatpush1.msra.mxu0 %v1152
  %1198 = vmatprep.subr.mxu0 0.0
  %1199 = vmatpush1.msra.mxu0 %v1151
  %1200 = vmatprep.subr.mxu0 0.0
  %1201 = vmatpush1.msra.mxu0 %v1150
  %1202 = vmatprep.subr.mxu0 0.0
  %1203 = vmatpush1.msra.mxu0 %v1149
  %1204 = vmatprep.subr.mxu0 0.0
  %1205 = vmatpush2.msra.mxu0 0.0
  %1206 = vmatprep.subr.mxu0 0.0
  %1207 = vmatpush2.msra.mxu0 0.0
  %1208 = vmatprep.subr.mxu0 0.0
  %1209 = vmatpush2.msra.mxu0 0.0
  %1210 = vmatprep.subr.mxu0 0.0
  %1211 = vmatpush2.msra.mxu0 0.0
  %1212 = vmatprep.subr.mxu0 0.0
  %1213 = vmatpush2.msra.mxu0 0.0
  %1214 = vmatprep.subr.mxu0 0.0
  %1215 = vmatpush2.msra.mxu0 0.0
  %1216 = vmatprep.subr.mxu0 0.0
  %1217 = vmatpush2.msra.mxu0 0.0
  %1218 = vmatprep.subr.mxu0 0.0
  %1219 = vmatpush2.msra.mxu0 0.0
  %1220 = vmatprep.subr.mxu0 0.0
  %1221 = vmatpush2.msra.mxu0 0.0
  %1222 = vmatprep.subr.mxu0 0.0
  %1223 = vmatpush2.msra.mxu0 0.0
  %1224 = vmatprep.subr.mxu0 0.0
  %1225 = vmatpush2.msra.mxu0 0.0
  %1226 = vmatprep.subr.mxu0 0.0
  %1227 = vmatpush2.msra.mxu0 0.0
  %1228 = vmatprep.subr.mxu0 0.0
  %1229 = vmatpush2.msra.mxu0 0.0
  %1230 = vmatprep.subr.mxu0 0.0
  %1231 = vmatpush2.msra.mxu0 0.0
  %1232 = vmatprep.subr.mxu0 0.0
  %1233 = vmatpush2.msra.mxu0 0.0
  %1234 = vmatprep.subr.mxu0 0.0
  %1235 = vmatpush2.msra.mxu0 0.0
  %1236 = vmatprep.mubr.f32.mxu0 0.0
  %1237 = vmatmul.mubr.f32.gmra.mxu0 %v1148
  %v1238 = vpop.f32.mrf.mxu0
  %v1239 = vadd.f32 %v1170, %v1238
  %v1240 = vpop.f32.mrf.mxu0
  %1241 = vdwg.mxu0
  %vm1242 = vcmask 39936
  %1243 = vst.msk [vmem:[%s8] sm:$0xff] %vm1242, %v1239
  // Predicated region
  $region34: #{lstm_classifier_forward.1} parent=0 // pred_check
    _
  $region35: #{lstm_classifier_forward.1} parent=0 // pred_check_branch
    %1245 = sbr.rel (0) target = $region37
  $region36: #{lstm_classifier_forward.1} parent=0 // pred_region
    _
  $region37: #{lstm_classifier_forward.1} parent=0 // pred_fallthru
    _
  // Predicated region
  $region38: #{lstm_classifier_forward.1} parent=0 // pred_check
    _
  $region39: #{lstm_classifier_forward.1} parent=0 // pred_check_branch
    %1247 = sbr.rel (0) target = $region41
  $region40: #{lstm_classifier_forward.1} parent=0 // pred_region
    _
  $region41: #{lstm_classifier_forward.1} parent=0 // pred_fallthru
    _

</llo_original>
